<compile_context>
chip_gen: v5e
topology: v5e:2x2
jax: 0.10.0
libtpu: 0.0.40
codegen_flags: <defaults>
</compile_context>

<pallas_src>
import functools
import math

import jax
import jax.numpy as jnp
from jax import lax
from jax.experimental import pallas as pl
from jax.experimental.pallas import tpu as pltpu

F32 = jnp.float32
BF16 = jnp.bfloat16
_INV_SQRT2 = 0.7071067811865476
_LN_EPS = 1e-5
_NEG_BIG = -1e30                       # finite "-inf" (avoids inf-inf NaNs)

_VMEM_LIMIT_CACHE = None


def _vmem_limit():
    """Generation-aware VMEM limit (~3/4 of physical; 48 MiB fallback)."""
    global _VMEM_LIMIT_CACHE
    if _VMEM_LIMIT_CACHE is None:
        limit = 48 * 1024 * 1024
        try:
            cap = getattr(pltpu.get_tpu_info(), "vmem_capacity_bytes", None)
            if cap:
                limit = max(limit, min(int(cap) * 3 // 4, 112 * 1024 * 1024))
        except Exception:
            pass
        _VMEM_LIMIT_CACHE = limit
    return _VMEM_LIMIT_CACHE


def _round_up(n, m):
    return -(-n // m) * m


def _gelu(x):
    # exact (erf) GELU, matching torch.nn.GELU default
    return 0.5 * x * (1.0 + lax.erf(x * _INV_SQRT2))


def _layer_norm(x, gamma, beta, eps=_LN_EPS):
    mu = jnp.mean(x, axis=-1, keepdims=True)
    xc = x - mu
    var = jnp.mean(xc * xc, axis=-1, keepdims=True)
    return xc * lax.rsqrt(var + eps) * gamma + beta


# ----------------------------------------------------------------------------
# Kernel 1: fused LayerNorm + projection  (Q from x_dst, KV from x_src)
# ----------------------------------------------------------------------------
def _ln_linear_kernel(x_ref, g_ref, b_ref, w_ref, o_ref):
    ln = _layer_norm(x_ref[...].astype(F32), g_ref[...], b_ref[...])
    o_ref[...] = jnp.dot(ln.astype(w_ref.dtype), w_ref[...],
                         preferred_element_type=F32).astype(o_ref.dtype)


def ln_linear(x, gamma, beta, w, *, row_tile=512, out_dtype=BF16):
    n, c = x.shape
    dout = w.shape[1]
    rt = min(_round_up(row_tile, 8), _round_up(n, 8))
    return pl.pallas_call(
        _ln_linear_kernel,
        out_shape=jax.ShapeDtypeStruct((n, dout), out_dtype),
        grid=(pl.cdiv(n, rt),),
        in_specs=[
            pl.BlockSpec((rt, c), lambda i: (i, 0)),       # x rows
            pl.BlockSpec((1, c), lambda i: (0, 0)),        # LN gamma
            pl.BlockSpec((1, c), lambda i: (0, 0)),        # LN beta
            pl.BlockSpec((c, dout), lambda i: (0, 0)),     # weight (bf16, grid-invariant)
        ],
        out_specs=pl.BlockSpec((rt, dout), lambda i: (i, 0)),
        compiler_params=pltpu.CompilerParams(
            dimension_semantics=("parallel",),
            vmem_limit_bytes=_vmem_limit()),
    )(x, gamma, beta, w)


# ----------------------------------------------------------------------------
# Kernel 2: flash-style cross-attention + fused output projection + residual
#   grid = (batch * q_tiles, kv_tiles); kv axis is an "arbitrary" reduction.
#   Scratch carries per-(head, q-row) online-softmax state (m, l, acc).
# ----------------------------------------------------------------------------
def _flash_attn_proj_kernel(q_ref, k_ref, v_ref, xd_ref, wp_ref, bp_ref,
                            o_ref, m_sc, l_sc, acc_sc, *,
                            num_heads, scale, ns_total, kv_tile, approx_recip):
    kidx = pl.program_id(1)

    @pl.when(kidx == 0)
    def _():
        m_sc[...] = jnp.full_like(m_sc, _NEG_BIG)
        l_sc[...] = jnp.zeros_like(l_sc)
        acc_sc[...] = jnp.zeros_like(acc_sc)

    q = q_ref[0]                       # (H, tq, d), stored dtype (bf16 fast path)
    k = k_ref[0]                       # (H, tk, d)
    v = v_ref[0]                       # (H, tk, d)
    tq, tk, d = q.shape[1], k.shape[1], v.shape[2]

    # head-batched scores; MXU operands in their stored dtype, f32 accumulate
    s = jnp.einsum("hqd,hkd->hqk", q, k,
                   preferred_element_type=F32) * scale           # (H, tq, tk)

    if ns_total % kv_tile != 0:
        # mask the padded (garbage) KV rows of the ragged last kv tile
        col_ok = (lax.broadcasted_iota(jnp.int32, (tq, tk), 1)
                  + kidx * kv_tile) < ns_total
        s = jnp.where(col_ok, s, _NEG_BIG)
        row_ok = (lax.broadcasted_iota(jnp.int32, (tk, d), 0)
                  + kidx * kv_tile) < ns_total
        v = jnp.where(row_ok, v, jnp.zeros_like(v))

    m_prev = m_sc[...]
    m_new = jnp.maximum(m_prev, jnp.max(s, axis=-1, keepdims=True))
    alpha = jnp.exp(m_prev - m_new)
    p = jnp.exp(s - m_new)
    l_sc[...] = alpha * l_sc[...] + jnp.sum(p, axis=-1, keepdims=True)
    acc_sc[...] = alpha * acc_sc[...] + jnp.einsum(
        "hqk,hkd->hqd", p.astype(v.dtype), v, preferred_element_type=F32)
    m_sc[...] = m_new

    @pl.when(kidx == pl.num_programs(1) - 1)
    def _():
        inv = pl.reciprocal(l_sc[...], approx=approx_recip)       # (H, tq, 1)
        attn = acc_sc[...] * inv                                  # (H, tq, d) f32
        # merge heads once per q-tile, then fused output projection + residual
        attn2d = jnp.concatenate([attn[h] for h in range(num_heads)], axis=-1)
        y = (xd_ref[0].astype(F32)
             + jnp.dot(attn2d.astype(wp_ref.dtype), wp_ref[...],
                       preferred_element_type=F32)
             + bp_ref[...])
        o_ref[0] = y.astype(o_ref.dtype)


def cross_attention_proj(q, kv, x_dst, wp, bp, batch_size, num_heads, *,
                         q_tile=512, kv_tile=512, approx_recip=True):
    n_dst, c = q.shape
    n_src = kv.shape[0]
    nd = n_dst // batch_size
    ns = n_src // batch_size
    d = c // num_heads

    # Head-major relayout at the XLA level so the kernel uses batch-leading,
    # head-batched dot_generals with no in-kernel transposes.
    q4 = q.reshape(batch_size, nd, num_heads, d).transpose(0, 2, 1, 3)
    k4 = kv[:, :c].reshape(batch_size, ns, num_heads, d).transpose(0, 2, 1, 3)
    v4 = kv[:, c:].reshape(batch_size, ns, num_heads, d).transpose(0, 2, 1, 3)
    xd3 = x_dst.reshape(batch_size, nd, c)

    tq = min(_round_up(q_tile, 8), _round_up(nd, 8))
    tk = min(_round_up(kv_tile, 8), _round_up(ns, 8))
    n_qt = pl.cdiv(nd, tq)
    n_kt = pl.cdiv(ns, tk)

    def q_map(i, kk):
        return (i // n_qt, 0, i % n_qt, 0)

    def kv_map(i, kk):
        return (i // n_qt, 0, kk, 0)

    def dst_map(i, kk):
        return (i // n_qt, i % n_qt, 0)

    def const_map(i, kk):
        return (0, 0)

    out = pl.pallas_call(
        functools.partial(_flash_attn_proj_kernel, num_heads=num_heads,
                          scale=1.0 / math.sqrt(d), ns_total=ns, kv_tile=tk,
                          approx_recip=approx_recip),
        out_shape=jax.ShapeDtypeStruct((batch_size, nd, c), F32),
        grid=(batch_size * n_qt, n_kt),
        in_specs=[
            pl.BlockSpec((1, num_heads, tq, d), q_map),     # Q tile (head-major)
            pl.BlockSpec((1, num_heads, tk, d), kv_map),    # K tile
            pl.BlockSpec((1, num_heads, tk, d), kv_map),    # V tile
            pl.BlockSpec((1, tq, c), dst_map),              # x_dst residual tile
            pl.BlockSpec((c, c), const_map),                # Wproj (bf16)
            pl.BlockSpec((1, c), const_map),                # bproj
        ],
        out_specs=pl.BlockSpec((1, tq, c), dst_map),
        scratch_shapes=[
            pltpu.VMEM((num_heads, tq, 1), F32),            # running max
            pltpu.VMEM((num_heads, tq, 1), F32),            # running denom
            pltpu.VMEM((num_heads, tq, d), F32),            # running numerator
        ],
        compiler_params=pltpu.CompilerParams(
            dimension_semantics=("parallel", "arbitrary"),
            vmem_limit_bytes=_vmem_limit()),
    )(q4, k4, v4, xd3, wp, bp)
    return out.reshape(n_dst, c)


# ----------------------------------------------------------------------------
# Kernel 3: pre-LN MLP with residual, hidden dimension tiled & accumulated
#   out = x1 + sum_j gelu(LN(x1) @ W1[:, j] + b1[j]) @ W2[j, :] + b2
# ----------------------------------------------------------------------------
def _mlp_kernel(x1_ref, g_ref, b_ref, w1_ref, b1_ref, w2_ref, b2_ref,
                o_ref, acc_ref, ln_ref):
    j = pl.program_id(1)

    @pl.when(j == 0)
    def _():
        x1 = x1_ref[...]                                   # f32 residual stream
        ln_ref[...] = _layer_norm(x1, g_ref[...], b_ref[...]).astype(ln_ref.dtype)
        acc_ref[...] = x1 + b2_ref[...]

    h = _gelu(jnp.dot(ln_ref[...], w1_ref[...], preferred_element_type=F32)
              + b1_ref[...])
    acc_ref[...] += jnp.dot(h.astype(w2_ref.dtype), w2_ref[...],
                            preferred_element_type=F32)

    @pl.when(j == pl.num_programs(1) - 1)
    def _():
        o_ref[...] = acc_ref[...].astype(o_ref.dtype)


def mlp_block(x1, ln_g, ln_b, w1, b1, w2, b2, *, row_tile=512, hidden_tile=2048):
    n, c = x1.shape
    hm = w1.shape[1]
    rt = min(_round_up(row_tile, 8), _round_up(n, 8))
    thm = min(hidden_tile, hm)
    if hm % thm or (thm % 128 and thm != hm):
        thm = hm                       # fall back to a single hidden tile
    return pl.pallas_call(
        _mlp_kernel,
        out_shape=jax.ShapeDtypeStruct((n, c), F32),
        grid=(pl.cdiv(n, rt), hm // thm),
        in_specs=[
            pl.BlockSpec((rt, c), lambda i, j: (i, 0)),    # x1 residual rows
            pl.BlockSpec((1, c), lambda i, j: (0, 0)),     # LN gamma
            pl.BlockSpec((1, c), lambda i, j: (0, 0)),     # LN beta
            pl.BlockSpec((c, thm), lambda i, j: (0, j)),   # W1 hidden tile (bf16)
            pl.BlockSpec((1, thm), lambda i, j: (0, j)),   # b1 hidden tile
            pl.BlockSpec((thm, c), lambda i, j: (j, 0)),   # W2 hidden tile (bf16)
            pl.BlockSpec((1, c), lambda i, j: (0, 0)),     # b2
        ],
        out_specs=pl.BlockSpec((rt, c), lambda i, j: (i, 0)),
        scratch_shapes=[pltpu.VMEM((rt, c), F32),          # f32 accumulator
                        pltpu.VMEM((rt, c), w1.dtype)],    # cached LN(x1)
        compiler_params=pltpu.CompilerParams(
            dimension_semantics=("parallel", "arbitrary"),
            vmem_limit_bytes=_vmem_limit()),
    )(x1, ln_g, ln_b, w1, b1, w2, b2)


# ----------------------------------------------------------------------------
# TransformerBaseMapper forward (JAX glue around the Pallas kernels)
# ----------------------------------------------------------------------------
def transformer_base_mapper_forward(params, x_src, x_dst, batch_size, num_heads,
                                    *, use_bf16=True, approx_recip=True,
                                    row_tile=512, q_tile=512, kv_tile=512,
                                    mlp_hidden_tile=2048):
    p = params
    n_dst, c = x_dst.shape
    assert c % num_heads == 0, "hidden_dim must be divisible by num_heads"
    assert n_dst % batch_size == 0 and x_src.shape[0] % batch_size == 0, \
        "node counts must be divisible by batch_size"

    wdt = BF16 if use_bf16 else F32
    inter_dt = BF16 if use_bf16 else F32
    wq, wkv = p["wq"].astype(wdt), p["wkv"].astype(wdt)
    wp, w1, w2 = p["wp"].astype(wdt), p["w1"].astype(wdt), p["w2"].astype(wdt)

    # pre_process: identity split (x_src / x_dst already carry hidden_dim)
    q = ln_linear(x_dst, p["ln_dst_g"], p["ln_dst_b"], wq,
                  row_tile=row_tile, out_dtype=inter_dt)
    kv = ln_linear(x_src, p["ln_src_g"], p["ln_src_b"], wkv,
                   row_tile=row_tile, out_dtype=inter_dt)
    x1 = cross_attention_proj(q, kv, x_dst, wp, p["bp"], batch_size, num_heads,
                              q_tile=q_tile, kv_tile=kv_tile,
                              approx_recip=approx_recip)
    y = mlp_block(x1, p["ln_mlp_g"], p["ln_mlp_b"], w1, p["b1"], w2, p["b2"],
                  row_tile=row_tile, hidden_tile=mlp_hidden_tile)
    # post_process: identity
    return y


# ----------------------------------------------------------------------------
# Pure-JAX reference (same math, full f32 precision) for correctness checks
# ----------------------------------------------------------------------------
def reference_forward(params, x_src, x_dst, batch_size, num_heads):
    p = params
    hp = lax.Precision.HIGHEST
    c = x_dst.shape[-1]
    d = c // num_heads
    nd = x_dst.shape[0] // batch_size
    ns = x_src.shape[0] // batch_size

    xs = _layer_norm(x_src, p["ln_src_g"], p["ln_src_b"])
    xd = _layer_norm(x_dst, p["ln_dst_g"], p["ln_dst_b"])
    q = jnp.dot(xd, p["wq"], precision=hp)
    kv = jnp.dot(xs, p["wkv"], precision=hp)
    k, v = kv[:, :c], kv[:, c:]

    def split_heads(t, n):
        return t.reshape(batch_size, n, num_heads, d).transpose(0, 2, 1, 3)

    qh, kh, vh = split_heads(q, nd), split_heads(k, ns), split_heads(v, ns)
    s = jnp.einsum("bhqd,bhkd->bhqk", qh, kh, precision=hp) / math.sqrt(d)
    w = jax.nn.softmax(s, axis=-1)
    oh = jnp.einsum("bhqk,bhkd->bhqd", w, vh, precision=hp)
    attn = oh.transpose(0, 2, 1, 3).reshape(batch_size * nd, c)

    x1 = x_dst + jnp.dot(attn, p["wp"], precision=hp) + p["bp"]
    h = _gelu(jnp.dot(_layer_norm(x1, p["ln_mlp_g"], p["ln_mlp_b"]),
                      p["w1"], precision=hp) + p["b1"])
    return x1 + jnp.dot(h, p["w2"], precision=hp) + p["b2"]


# ----------------------------------------------------------------------------
# Deterministic parameter init
# ----------------------------------------------------------------------------
def init_params(key, c, mlp_hidden):
    ks = jax.random.split(key, 14)

    def w(k, din, dout):
        return (1.0 / math.sqrt(din)) * jax.random.normal(k, (din, dout), F32)

    def ln(kg, kb):
        return (1.0 + 0.1 * jax.random.normal(kg, (1, c), F32),
                0.05 * jax.random.normal(kb, (1, c), F32))

    ln_src_g, ln_src_b = ln(ks[0], ks[1])
    ln_dst_g, ln_dst_b = ln(ks[2], ks[3])
    ln_mlp_g, ln_mlp_b = ln(ks[4], ks[5])
    return dict(
        ln_src_g=ln_src_g, ln_src_b=ln_src_b,
        ln_dst_g=ln_dst_g, ln_dst_b=ln_dst_b,
        ln_mlp_g=ln_mlp_g, ln_mlp_b=ln_mlp_b,
        wq=w(ks[6], c, c),                   # lin_q   (bias=False)
        wkv=w(ks[7], c, 2 * c),              # lin_kv  (bias=False)
        wp=w(ks[8], c, c),                   # attention output projection
        bp=0.02 * jax.random.normal(ks[9], (1, c), F32),
        w1=w(ks[10], c, mlp_hidden),         # MLP Linear 1
        b1=0.02 * jax.random.normal(ks[11], (1, mlp_hidden), F32),
        w2=w(ks[12], mlp_hidden, c),         # MLP Linear 2
        b2=0.02 * jax.random.normal(ks[13], (1, c), F32),
    )


if __name__ == "__main__":
    # small synthetic configuration consistent with the module
    hidden_dim = 64            # num_channels of the mapper block
    num_heads = 4              # -> head dim 16
    mlp_hidden_ratio = 4       # -> mlp hidden 256
    batch_size = 2
    src_grid = 40              # hidden-mesh nodes per sample (k/v side)
    dst_grid = 24              # data-mesh nodes per sample   (query side)

    key = jax.random.PRNGKey(0)
    kp, kx, ky = jax.random.split(key, 3)
    params = init_params(kp, hidden_dim, mlp_hidden_ratio * hidden_dim)
    x_src = jax.random.normal(kx, (batch_size * src_grid, hidden_dim), F32)
    x_dst = jax.random.normal(ky, (batch_size * dst_grid, hidden_dim), F32)

    y_ref = jax.block_until_ready(
        reference_forward(params, x_src, x_dst, batch_size, num_heads))

    # parity path: f32 weights/intermediates, exact reciprocal -> tight tol
    y32 = jax.block_until_ready(
        transformer_base_mapper_forward(params, x_src, x_dst, batch_size,
                                        num_heads, use_bf16=False,
                                        approx_recip=False))
    assert y32.shape == (batch_size * dst_grid, hidden_dim), y32.shape
    assert jnp.allclose(y32, y_ref, rtol=2e-3, atol=2e-3), \
        float(jnp.max(jnp.abs(y32 - y_ref)))

    # fast path: bf16 weights + intermediates, EUP approx reciprocal
    y16 = jax.block_until_ready(
        transformer_base_mapper_forward(params, x_src, x_dst, batch_size,
                                        num_heads, use_bf16=True,
                                        approx_recip=True))
    assert y16.shape == (batch_size * dst_grid, hidden_dim), y16.shape
    assert jnp.allclose(y16, y_ref, rtol=5e-2, atol=5e-2), \
        float(jnp.max(jnp.abs(y16 - y_ref)))

    # coverage: small tiles so the flash kv loop (incl. a ragged, masked last
    # kv tile), ragged q tiles, and the hm-tiled MLP accumulator are exercised
    y_tiled = jax.block_until_ready(
        transformer_base_mapper_forward(params, x_src, x_dst, batch_size,
                                        num_heads, use_bf16=True,
                                        approx_recip=True, row_tile=16,
                                        q_tile=16, kv_tile=16,
                                        mlp_hidden_tile=128))
    assert jnp.allclose(y_tiled, y_ref, rtol=5e-2, atol=5e-2), \
        float(jnp.max(jnp.abs(y_tiled - y_ref)))

    print("KERNEL_OK")
</pallas_src>

<mosaic_0001>
module attributes {stable_mosaic.version = 11 : i64} {
  func.func @_ln_linear_kernel(%arg0: i32, %arg1: memref<48x64xf32, #tpu.memory_space<vmem>>, %arg2: memref<1x64xf32, #tpu.memory_space<vmem>>, %arg3: memref<1x64xf32, #tpu.memory_space<vmem>>, %arg4: memref<64x64xf32, #tpu.memory_space<vmem>>, %arg5: memref<48x64xf32, #tpu.memory_space<vmem>>) attributes {dimension_semantics = [#tpu.dimension_semantics<parallel>], iteration_bounds = array<i64: 1>, scalar_prefetch = 0 : i64, scratch_operands = 0 : i64, tpu.core_type = #tpu.core_type<tc>, window_params = [{transform_indices = @transform_0, window_bounds = array<i64: 48, 64>}, {pipeline_mode = #tpu.pipeline_mode<synchronous>, transform_indices = @transform_1, window_bounds = array<i64: 1, 64>}, {pipeline_mode = #tpu.pipeline_mode<synchronous>, transform_indices = @transform_2, window_bounds = array<i64: 1, 64>}, {pipeline_mode = #tpu.pipeline_mode<synchronous>, transform_indices = @transform_3, window_bounds = array<i64: 64, 64>}, {transform_indices = @transform_4, window_bounds = array<i64: 48, 64>}]} {
    %c0 = arith.constant 0 : index
    %c0_0 = arith.constant 0 : index
    %0 = vector.load %arg1[%c0, %c0_0] : memref<48x64xf32, #tpu.memory_space<vmem>>, vector<48x64xf32>
    %c0_1 = arith.constant 0 : index
    %c0_2 = arith.constant 0 : index
    %1 = vector.load %arg2[%c0_1, %c0_2] : memref<1x64xf32, #tpu.memory_space<vmem>>, vector<1x64xf32>
    %c0_3 = arith.constant 0 : index
    %c0_4 = arith.constant 0 : index
    %2 = vector.load %arg3[%c0_3, %c0_4] : memref<1x64xf32, #tpu.memory_space<vmem>>, vector<1x64xf32>
    %cst = arith.constant dense<0.000000e+00> : vector<48xf32>
    %3 = vector.multi_reduction <add>, %0, %cst [1] : vector<48x64xf32> to vector<48xf32>
    %4 = vector.shape_cast %3 : vector<48xf32> to vector<48x1xf32>
    %cst_5 = arith.constant 6.400000e+01 : f32
    %5 = vector.broadcast %cst_5 : f32 to vector<48x1xf32>
    %6 = arith.divf %4, %5 : vector<48x1xf32>
    %7 = vector.broadcast %6 : vector<48x1xf32> to vector<48x64xf32>
    %8 = arith.subf %0, %7 : vector<48x64xf32>
    %9 = arith.mulf %8, %8 : vector<48x64xf32>
    %cst_6 = arith.constant dense<0.000000e+00> : vector<48xf32>
    %10 = vector.multi_reduction <add>, %9, %cst_6 [1] : vector<48x64xf32> to vector<48xf32>
    %11 = vector.shape_cast %10 : vector<48xf32> to vector<48x1xf32>
    %cst_7 = arith.constant 6.400000e+01 : f32
    %12 = vector.broadcast %cst_7 : f32 to vector<48x1xf32>
    %13 = arith.divf %11, %12 : vector<48x1xf32>
    %cst_8 = arith.constant 9.99999974E-6 : f32
    %14 = vector.broadcast %cst_8 : f32 to vector<48x1xf32>
    %15 = arith.addf %13, %14 : vector<48x1xf32>
    %16 = math.rsqrt %15 : vector<48x1xf32>
    %17 = vector.broadcast %16 : vector<48x1xf32> to vector<48x64xf32>
    %18 = arith.mulf %8, %17 : vector<48x64xf32>
    %19 = vector.broadcast %1 : vector<1x64xf32> to vector<48x64xf32>
    %20 = arith.mulf %18, %19 : vector<48x64xf32>
    %21 = vector.broadcast %2 : vector<1x64xf32> to vector<48x64xf32>
    %22 = arith.addf %20, %21 : vector<48x64xf32>
    %c0_9 = arith.constant 0 : index
    %c0_10 = arith.constant 0 : index
    %23 = vector.load %arg4[%c0_9, %c0_10] : memref<64x64xf32, #tpu.memory_space<vmem>>, vector<64x64xf32>
    %cst_11 = arith.constant dense<0.000000e+00> : vector<48x64xf32>
    %24 = tpu.matmul %22, %23, %cst_11 {dimension_numbers = #tpu.dot_dimension_numbers<[1], [0], [0], [1], [0, 0, 1, 1], [], []>} : vector<48x64xf32>, vector<64x64xf32>, vector<48x64xf32> -> vector<48x64xf32>
    %c0_12 = arith.constant 0 : index
    %c0_13 = arith.constant 0 : index
    %25 = vector.load %arg5[%c0_12, %c0_13] : memref<48x64xf32, #tpu.memory_space<vmem>>, vector<48x64xf32>
    tpu.vector_store %arg5[%c0_12, %c0_13], %24 {strides = array<i32>} : memref<48x64xf32, #tpu.memory_space<vmem>>, vector<48x64xf32>,
    return
  }
  func.func @transform_0(%arg0: i32) -> (i32, i32) {
    %c0_i32 = arith.constant 0 : i32
    %c0_i32_0 = arith.constant 0 : i32
    return %arg0, %c0_i32 : i32, i32
  }
  func.func @transform_1(%arg0: i32) -> (i32, i32) {
    %c0_i32 = arith.constant 0 : i32
    %c0_i32_0 = arith.constant 0 : i32
    %c0_i32_1 = arith.constant 0 : i32
    return %c0_i32, %c0_i32_0 : i32, i32
  }
  func.func @transform_2(%arg0: i32) -> (i32, i32) {
    %c0_i32 = arith.constant 0 : i32
    %c0_i32_0 = arith.constant 0 : i32
    %c0_i32_1 = arith.constant 0 : i32
    return %c0_i32, %c0_i32_0 : i32, i32
  }
  func.func @transform_3(%arg0: i32) -> (i32, i32) {
    %c0_i32 = arith.constant 0 : i32
    %c0_i32_0 = arith.constant 0 : i32
    %c0_i32_1 = arith.constant 0 : i32
    return %c0_i32, %c0_i32_0 : i32, i32
  }
  func.func @transform_4(%arg0: i32) -> (i32, i32) {
    %c0_i32 = arith.constant 0 : i32
    %c0_i32_0 = arith.constant 0 : i32
    return %arg0, %c0_i32 : i32, i32
  }
}

</mosaic_0001>

<llo_original>
// kernel: tpu_custom_call.1
$region0: #{tpu_custom_call.1}
  #allocation0 [shape = 'u32[]', space=smem, size = 0x4, offset = 0x4, fixed_abs, tag = 'smem constant byte address 0x4 - core index']
  #allocation1 [shape = 'u32[72,128]{1,0:T(1,128)}', space=vmem, size = 0x9000, scoped, tag = 'internal scratch']
  %s0 = inlined_call_operand.hbm [shape: f32[48,64], index: 0, kind: input, shape index: {}]
  %s1 = inlined_call_operand.hbm [shape: f32[1,64], index: 1, kind: input, shape index: {}]
  %s2 = inlined_call_operand.vmem [shape: f32[1,64], index: 2, kind: input, shape index: {}]
  %s3 = inlined_call_operand.hbm [shape: f32[64,64], index: 3, kind: input, shape index: {}]
  %s4 = inlined_call_operand.hbm [shape: f32[48,64], index: 4, kind: output, shape index: {}]
  %s5 = sld [smem:[#allocation0]]
  $region38: #{tpu_custom_call.1} parent=0
    _
  %s7 = ssub.s32 1, %s5
  %s8 = scalar_select 0, %s7, %s5
  $region1: #{tpu_custom_call.1} parent=0
    #allocation2 [shape = 'u8[24576]{0}', space=vmem, size = 0x6000, scoped, tag = 'input window, operand 0, single buffered']
    #allocation3 [shape = 's32[1]{0}', space=sflag, size = 0x4, scoped, tag = 'scoped memory for tpu_custom_call.1']
    #allocation4 [shape = 's32[1]{0}', space=sflag, size = 0x4, scoped, tag = 'scoped memory for tpu_custom_call.1']
    #allocation5 [shape = 'u8[512]{0}', space=vmem, size = 0x400, scoped, tag = 'input window, operand 1, single buffered']
    #allocation6 [shape = 's32[1]{0}', space=sflag, size = 0x4, scoped, tag = 'scoped memory for tpu_custom_call.1']
    #allocation7 [shape = 'u8[32768]{0}', space=vmem, size = 0x8000, scoped, tag = 'input window, operand 3, single buffered']
    #allocation8 [shape = 'u8[24576]{0}', space=vmem, size = 0x6000, scoped, tag = 'output window, operand 0, single buffered']
    %9 = vsyncpa [#allocation3], 0
    %10 = vsyncpa [#allocation6], 0
    %11 = vsyncpa [#allocation4], 0
    // Predicated region
    $region2: #{tpu_custom_call.1} parent=1 // pred_check
      _
    $region3: #{tpu_custom_call.1} parent=1 // pred_check_branch
      %13 = sbr.rel (0) target = $region5
    $region4: #{tpu_custom_call.1} parent=1 // pred_region
      %15 = vsyncadd [#allocation3], 0
      %s16 = sshll.u32 %s0, 4
      %s17 = int_to_ptr.hbm [resolvable:$true] %s16
      %s18 = sshll.u32 [#allocation2], 4
      %s19 = int_to_ptr.vmem [resolvable:$true] %s18
      %24 = dma.hbm_to_vmem [thread:$0]  %s17, 768, %s19, [#allocation3], 128, 128, 8
    $region5: #{tpu_custom_call.1} parent=1 // pred_fallthru
      _
    // Predicated region
    $region6: #{tpu_custom_call.1} parent=1 // pred_check
      _
    $region7: #{tpu_custom_call.1} parent=1 // pred_check_branch
      %26 = sbr.rel (0) target = $region9
    $region8: #{tpu_custom_call.1} parent=1 // pred_region
      %28 = vsyncadd [#allocation6], 0
      %s30 = sshll.u32 %s1, 4
      %s31 = int_to_ptr.hbm [resolvable:$true] %s30
      %s32 = sshll.u32 [#allocation5], 4
      %s33 = int_to_ptr.vmem [resolvable:$true] %s32
      %35 = dma.hbm_to_vmem [thread:$0]  %s31, 16, %s33, [#allocation6]
    $region9: #{tpu_custom_call.1} parent=1 // pred_fallthru
      _
    // Predicated region
    $region10: #{tpu_custom_call.1} parent=1 // pred_check
      _
    $region11: #{tpu_custom_call.1} parent=1 // pred_check_branch
      %37 = sbr.rel (0) target = $region13
    $region12: #{tpu_custom_call.1} parent=1 // pred_region
      _
    $region13: #{tpu_custom_call.1} parent=1 // pred_fallthru
      _
    // Predicated region
    $region14: #{tpu_custom_call.1} parent=1 // pred_check
      _
    $region15: #{tpu_custom_call.1} parent=1 // pred_check_branch
      %39 = sbr.rel (0) target = $region17
    $region16: #{tpu_custom_call.1} parent=1 // pred_region
      %41 = vsyncadd [#allocation6], 0
      %s42 = sshll.u32 %s3, 4
      %s43 = int_to_ptr.hbm [resolvable:$true] %s42
      %s44 = sshll.u32 [#allocation7], 4
      %s45 = int_to_ptr.vmem [resolvable:$true] %s44
      %50 = dma.hbm_to_vmem [thread:$0]  %s43, 1024, %s45, [#allocation6], 128, 128, 8
    $region17: #{tpu_custom_call.1} parent=1 // pred_fallthru
      _
    // Predicated region
    $region18: #{tpu_custom_call.1} parent=1 // pred_check
      _
    $region19: #{tpu_custom_call.1} parent=1 // pred_check_branch
      %52 = sbr.rel (0) target = $region21
    $region20: #{tpu_custom_call.1} parent=1 // pred_region
      %54 = dma.done [#allocation3], 768
    $region21: #{tpu_custom_call.1} parent=1 // pred_fallthru
      _
    // Predicated region
    $region22: #{tpu_custom_call.1} parent=1 // pred_check
      _
    $region23: #{tpu_custom_call.1} parent=1 // pred_check_branch
      %56 = sbr.rel (0) target = $region25
    $region24: #{tpu_custom_call.1} parent=1 // pred_region
      %58 = dma.done [#allocation6], 16
    $region25: #{tpu_custom_call.1} parent=1 // pred_fallthru
      _
    // Predicated region
    $region26: #{tpu_custom_call.1} parent=1 // pred_check
      _
    $region27: #{tpu_custom_call.1} parent=1 // pred_check_branch
      %60 = sbr.rel (0) target = $region29
    $region28: #{tpu_custom_call.1} parent=1 // pred_region
      %62 = dma.done [#allocation6], 1024
    $region29: #{tpu_custom_call.1} parent=1 // pred_fallthru
      _
    %v63 = vld [vmem:[#allocation2] sm:$0xff]
    %v64 = vld [vmem:[#allocation2 + $0x8] sm:$0xff]
    %v65 = vld [vmem:[#allocation2 + $0x10] sm:$0xff]
    %v66 = vld [vmem:[#allocation2 + $0x18] sm:$0xff]
    %v67 = vld [vmem:[#allocation2 + $0x20] sm:$0xff]
    %v68 = vld [vmem:[#allocation2 + $0x28] sm:$0xff]
    %v69 = vld [vmem:[#allocation5] sm:$0x1]
    %v70 = vld [vmem:[%s2] sm:$0x1]
    %vm71 = vcmask 523264
    %v72 = vsel %vm71, %v63, 0.0
    %73 = vadd.xlane.f32.xlu0 %v72
    %v74 = vpop.xlane.xlu0 %73
    %v75 = vsel %vm71, %v64, 0.0
    %76 = vadd.xlane.f32.xlu0 %v75
    %v77 = vpop.xlane.xlu0 %76
    %v78 = vsel %vm71, %v65, 0.0
    %79 = vadd.xlane.f32.xlu0 %v78
    %v80 = vpop.xlane.xlu0 %79
    %v81 = vsel %vm71, %v66, 0.0
    %82 = vadd.xlane.f32.xlu0 %v81
    %v83 = vpop.xlane.xlu0 %82
    %v84 = vsel %vm71, %v67, 0.0
    %85 = vadd.xlane.f32.xlu0 %v84
    %v86 = vpop.xlane.xlu0 %85
    %v87 = vsel %vm71, %v68, 0.0
    %88 = vadd.xlane.f32.xlu0 %v87
    %v89 = vpop.xlane.xlu0 %88
    %v90 = vrcp.pop 64.0
    %v91 = vmul.f32 64.0, %v90
    %v92 = vsub.f32 1.0, %v91
    %v93 = vmul.f32 %v90, %v92
    %v94 = vadd.f32 %v90, %v93
    %vm95 = vweird.f32 %v90
    %v96 = vsel %vm95, %v90, %v94
    %v97 = vmul.f32 %v74, %v96
    %v98 = vmul.f32 %v77, %v96
    %v99 = vmul.f32 %v80, %v96
    %v100 = vmul.f32 %v83, %v96
    %v101 = vmul.f32 %v86, %v96
    %v102 = vmul.f32 %v89, %v96
    %v103 = vsub.f32 %v63, %v97
    %v104 = vsub.f32 %v64, %v98
    %v105 = vsub.f32 %v65, %v99
    %v106 = vsub.f32 %v66, %v100
    %v107 = vsub.f32 %v67, %v101
    %v108 = vsub.f32 %v68, %v102
    %v109 = vmul.f32 %v103, %v103
    %v110 = vmul.f32 %v104, %v104
    %v111 = vmul.f32 %v105, %v105
    %v112 = vmul.f32 %v106, %v106
    %v113 = vmul.f32 %v107, %v107
    %v114 = vmul.f32 %v108, %v108
    %v115 = vsel %vm71, %v109, 0.0
    %116 = vadd.xlane.f32.xlu0 %v115
    %v117 = vpop.xlane.xlu0 %116
    %v118 = vsel %vm71, %v110, 0.0
    %119 = vadd.xlane.f32.xlu0 %v118
    %v120 = vpop.xlane.xlu0 %119
    %v121 = vsel %vm71, %v111, 0.0
    %122 = vadd.xlane.f32.xlu0 %v121
    %v123 = vpop.xlane.xlu0 %122
    %v124 = vsel %vm71, %v112, 0.0
    %125 = vadd.xlane.f32.xlu0 %v124
    %v126 = vpop.xlane.xlu0 %125
    %v127 = vsel %vm71, %v113, 0.0
    %128 = vadd.xlane.f32.xlu0 %v127
    %v129 = vpop.xlane.xlu0 %128
    %v130 = vsel %vm71, %v114, 0.0
    %131 = vadd.xlane.f32.xlu0 %v130
    %v132 = vpop.xlane.xlu0 %131
    %v133 = vmul.f32 %v117, %v96
    %v134 = vmul.f32 %v120, %v96
    %v135 = vmul.f32 %v123, %v96
    %v136 = vmul.f32 %v126, %v96
    %v137 = vmul.f32 %v129, %v96
    %v138 = vmul.f32 %v132, %v96
    %v139 = vadd.f32 %v133, 1e-05
    %v140 = vadd.f32 %v134, 1e-05
    %v141 = vadd.f32 %v135, 1e-05
    %v142 = vadd.f32 %v136, 1e-05
    %v143 = vadd.f32 %v137, 1e-05
    %v144 = vadd.f32 %v138, 1e-05
    %v145 = vrsqrt.pop %v139
    %v146 = vmul.f32 %v145, %v139
    %v147 = vmul.f32 %v146, %v145
    %v148 = vmul.f32 0.5, %v147
    %v149 = vsub.f32 1.5, %v148
    %v150 = vmul.f32 %v145, %v149
    %vm151 = vweird.f32 %v139
    %vm152 = vweird.f32 %v145
    %vm153 = vmor %vm151, %vm152
    %v154 = vsel %vm153, %v145, %v150
    %v155 = vrsqrt.pop %v140
    %v156 = vmul.f32 %v155, %v140
    %v157 = vmul.f32 %v156, %v155
    %v158 = vmul.f32 0.5, %v157
    %v159 = vsub.f32 1.5, %v158
    %v160 = vmul.f32 %v155, %v159
    %vm161 = vweird.f32 %v140
    %vm162 = vweird.f32 %v155
    %vm163 = vmor %vm161, %vm162
    %v164 = vsel %vm163, %v155, %v160
    %v165 = vrsqrt.pop %v141
    %v166 = vmul.f32 %v165, %v141
    %v167 = vmul.f32 %v166, %v165
    %v168 = vmul.f32 0.5, %v167
    %v169 = vsub.f32 1.5, %v168
    %v170 = vmul.f32 %v165, %v169
    %vm171 = vweird.f32 %v141
    %vm172 = vweird.f32 %v165
    %vm173 = vmor %vm171, %vm172
    %v174 = vsel %vm173, %v165, %v170
    %v175 = vrsqrt.pop %v142
    %v176 = vmul.f32 %v175, %v142
    %v177 = vmul.f32 %v176, %v175
    %v178 = vmul.f32 0.5, %v177
    %v179 = vsub.f32 1.5, %v178
    %v180 = vmul.f32 %v175, %v179
    %vm181 = vweird.f32 %v142
    %vm182 = vweird.f32 %v175
    %vm183 = vmor %vm181, %vm182
    %v184 = vsel %vm183, %v175, %v180
    %v185 = vrsqrt.pop %v143
    %v186 = vmul.f32 %v185, %v143
    %v187 = vmul.f32 %v186, %v185
    %v188 = vmul.f32 0.5, %v187
    %v189 = vsub.f32 1.5, %v188
    %v190 = vmul.f32 %v185, %v189
    %vm191 = vweird.f32 %v143
    %vm192 = vweird.f32 %v185
    %vm193 = vmor %vm191, %vm192
    %v194 = vsel %vm193, %v185, %v190
    %v195 = vrsqrt.pop %v144
    %v196 = vmul.f32 %v195, %v144
    %v197 = vmul.f32 %v196, %v195
    %v198 = vmul.f32 0.5, %v197
    %v199 = vsub.f32 1.5, %v198
    %v200 = vmul.f32 %v195, %v199
    %vm201 = vweird.f32 %v144
    %vm202 = vweird.f32 %v195
    %vm203 = vmor %vm201, %vm202
    %v204 = vsel %vm203, %v195, %v200
    %v205 = vmul.f32 %v103, %v154
    %v206 = vmul.f32 %v104, %v164
    %v207 = vmul.f32 %v105, %v174
    %v208 = vmul.f32 %v106, %v184
    %v209 = vmul.f32 %v107, %v194
    %v210 = vmul.f32 %v108, %v204
    %v212 = vperm.slane %v69, 0
    %v214 = vmul.f32 %v205, %v212
    %v215 = vmul.f32 %v206, %v212
    %v216 = vmul.f32 %v207, %v212
    %v217 = vmul.f32 %v208, %v212
    %v218 = vmul.f32 %v209, %v212
    %v219 = vmul.f32 %v210, %v212
    %v221 = vperm.slane %v70, 0
    %v223 = vadd.f32 %v214, %v221
    %v224 = vadd.f32 %v215, %v221
    %v225 = vadd.f32 %v216, %v221
    %v226 = vadd.f32 %v217, %v221
    %v227 = vadd.f32 %v218, %v221
    %v228 = vadd.f32 %v219, %v221
    %v229 = vld [vmem:[#allocation7] sm:$0xff]
    %v230 = vld [vmem:[#allocation7 + $0x8] sm:$0xff]
    %v231 = vld [vmem:[#allocation7 + $0x10] sm:$0xff]
    %v232 = vld [vmem:[#allocation7 + $0x18] sm:$0xff]
    %v233 = vld [vmem:[#allocation7 + $0x20] sm:$0xff]
    %v234 = vld [vmem:[#allocation7 + $0x28] sm:$0xff]
    %v235 = vld [vmem:[#allocation7 + $0x30] sm:$0xff]
    %v236 = vld [vmem:[#allocation7 + $0x38] sm:$0xff]
    %v238 = vsel %vm71, %v223, 0
    %v241 = vsel %vm71, %v224, 0
    %v244 = vsel %vm71, %v225, 0
    %v247 = vsel %vm71, %v226, 0
    %v250 = vsel %vm71, %v227, 0
    %v253 = vsel %vm71, %v228, 0
    %255 = vmatpush.msra.mxu0 0.0
    %256 = vmatpush.msra.mxu0 0.0
    %257 = vmatpush.msra.mxu0 0.0
    %258 = vmatpush.msra.mxu0 0.0
    %259 = vmatpush.msra.mxu0 0.0
    %260 = vmatpush.msra.mxu0 0.0
    %261 = vmatpush.msra.mxu0 0.0
    %262 = vmatpush.msra.mxu0 0.0
    %263 = vmatpush.msra.mxu0 %v236
    %264 = vmatpush.msra.mxu0 %v235
    %265 = vmatpush.msra.mxu0 %v234
    %266 = vmatpush.msra.mxu0 %v233
    %267 = vmatpush.msra.mxu0 %v232
    %268 = vmatpush.msra.mxu0 %v231
    %269 = vmatpush.msra.mxu0 %v230
    %270 = vmatpush.msra.mxu0 %v229
    %271 = vmatmul.f32.gmra.mxu0 %v238
    %v272 = vpop.f32.mrf.mxu0
    %v273 = vadd.f32 0.0, %v272
    %274 = vmatmul.f32.gmra.mxu0 %v241
    %v275 = vpop.f32.mrf.mxu0
    %v276 = vadd.f32 0.0, %v275
    %277 = vmatmul.f32.gmra.mxu0 %v244
    %v278 = vpop.f32.mrf.mxu0
    %v279 = vadd.f32 0.0, %v278
    %280 = vmatmul.f32.gmra.mxu0 %v247
    %v281 = vpop.f32.mrf.mxu0
    %v282 = vadd.f32 0.0, %v281
    %283 = vmatmul.f32.gmra.mxu0 %v250
    %v284 = vpop.f32.mrf.mxu0
    %v285 = vadd.f32 0.0, %v284
    %286 = vmatmul.f32.gmra.mxu0 %v253
    %v287 = vpop.f32.mrf.mxu0
    %v288 = vadd.f32 0.0, %v287
    %289 = vdwg.mxu0
    %290 = vst.msk [vmem:[#allocation8] sm:$0xff] %vm71, %v273
    %291 = vst.msk [vmem:[#allocation8 + $0x8] sm:$0xff] %vm71, %v276
    %292 = vst.msk [vmem:[#allocation8 + $0x10] sm:$0xff] %vm71, %v279
    %293 = vst.msk [vmem:[#allocation8 + $0x18] sm:$0xff] %vm71, %v282
    %294 = vst.msk [vmem:[#allocation8 + $0x20] sm:$0xff] %vm71, %v285
    %295 = vst.msk [vmem:[#allocation8 + $0x28] sm:$0xff] %vm71, %v288
    // Predicated region
    $region30: #{tpu_custom_call.1} parent=1 // pred_check
      _
    $region31: #{tpu_custom_call.1} parent=1 // pred_check_branch
      %297 = sbr.rel (0) target = $region33
    $region32: #{tpu_custom_call.1} parent=1 // pred_region
      %299 = vsyncadd [#allocation4], 0
      %s300 = sshll.u32 [#allocation8], 4
      %s301 = int_to_ptr.vmem [resolvable:$true] %s300
      %s302 = sshll.u32 %s4, 4
      %s303 = int_to_ptr.hbm [resolvable:$true] %s302
      %308 = dma.vmem_to_hbm [thread:$0]  %s301, 768, %s303, [#allocation4], 128, 128, 8
    $region33: #{tpu_custom_call.1} parent=1 // pred_fallthru
      _
    // Predicated region
    $region34: #{tpu_custom_call.1} parent=1 // pred_check
      _
    $region35: #{tpu_custom_call.1} parent=1 // pred_check_branch
      %310 = sbr.rel (0) target = $region37
    $region36: #{tpu_custom_call.1} parent=1 // pred_region
      %312 = dma.done [#allocation4], 768
    $region37: #{tpu_custom_call.1} parent=1 // pred_fallthru
      _
    %313 = vsyncpa [#allocation3], 1
    %314 = vsyncpa [#allocation6], 1
    %315 = vsyncpa [#allocation4], 1

</llo_original>
